<compile_context>
chip_gen: v5e
topology: v5e:2x2
jax: 0.10.0
libtpu: 0.0.40
codegen_flags: <defaults>
</compile_context>

<pallas_src>
import jax
import jax.numpy as jnp
from jax.experimental import pallas as pl
from jax.experimental.pallas import tpu as pltpu


EPS = 1e-5


def _normalize(x):
    """PyTorch-style normalizer: per-channel mean / unbiased std over spatial."""
    n = x.shape[-1]
    mean = jnp.mean(x, axis=-1, keepdims=True)
    d = x - mean
    # torch.Tensor.var defaults to unbiased (N - 1 denominator)
    var = jnp.sum(d * d, axis=-1, keepdims=True) * (1.0 / (n - 1))
    return d * jax.lax.rsqrt(var + EPS)


def sa_block_kernel(c_ref, s_ref, w_ref, b_ref, o_ref, cf_s, sf_s, xf_s):
    """One (batch, query-tile) step.

    c_ref, s_ref : (1, C, HW)  f32 input slabs (resident for the whole batch)
    w_ref        : (4, C, C)   stacked 1x1-conv weights in compute dtype
    b_ref        : (C, 4)      stacked biases, f32
    o_ref        : (1, C, TQ)  output tile
    cf_s/sf_s/xf_s : (C, HW)   VMEM scratch in compute dtype (persist over q)
    """
    q = pl.program_id(1)
    tq = o_ref.shape[2]
    cdt = cf_s.dtype  # compute dtype for MXU operands

    # ---- per-batch prep: 1x1 convs on normalized c / s, runs once (q == 0) --
    @pl.when(q == 0)
    def _prep():
        c = c_ref[0]                                   # (C, HW) f32
        s = s_ref[0]
        cn = _normalize(c).astype(cdt)                 # f32 stats, then cast
        sn = _normalize(s).astype(cdt)
        sx = s.astype(cdt)
        cf = jnp.dot(w_ref[0], cn, preferred_element_type=jnp.float32) + b_ref[:, 0:1]
        sf = jnp.dot(w_ref[1], sn, preferred_element_type=jnp.float32) + b_ref[:, 1:2]
        xf = jnp.dot(w_ref[2], sx, preferred_element_type=jnp.float32) + b_ref[:, 2:3]
        cf_s[...] = cf.astype(cdt)
        sf_s[...] = sf.astype(cdt)
        xf_s[...] = xf.astype(cdt)

    # ---- per-query-tile attention (exact softmax over full KV axis) ---------
    q0 = pl.multiple_of(q * tq, tq)
    cf_q = cf_s[:, pl.ds(q0, tq)]                      # (C, TQ)

    # scores[p, kv] = sum_c cf_q[c, p] * sf[c, kv]  -> (TQ, HW), no transpose copy
    scores = jax.lax.dot_general(
        cf_q, sf_s[...], (((0,), (0,)), ((), ())),
        preferred_element_type=jnp.float32)
    scores = scores - jnp.max(scores, axis=-1, keepdims=True)
    p = jnp.exp(scores)                                # f32 softmax math (EUP)
    denom = jnp.sum(p, axis=-1, keepdims=True)         # (TQ, 1)
    r = pl.reciprocal(denom, approx=True)              # EUP vrcp (own slot)
    r = r * (2.0 - denom * r)                          # one Newton step (tiny col)
    p = (p * r).astype(cdt)

    # of[c, p] = sum_kv xf[c, kv] * p[p, kv]  -> (C, TQ), no transpose copy
    of = jax.lax.dot_general(
        xf_s[...], p, (((1,), (1,)), ((), ())),
        preferred_element_type=jnp.float32)

    # output 1x1 conv + bias + residual
    out = jnp.dot(w_ref[3], of.astype(cdt), preferred_element_type=jnp.float32)
    out = out + b_ref[:, 3:4] + c_ref[0, :, pl.ds(q0, tq)]
    o_ref[0] = out.astype(o_ref.dtype)


def _pick_tile_q(hw, desired):
    """Largest multiple-of-128 query tile <= desired that divides HW."""
    if hw % 128 != 0:
        return hw                      # tiny / odd spatial: single tile
    tq = min(desired, hw)
    tq -= tq % 128
    tq = max(tq, 128)
    while hw % tq != 0:
        tq -= 128
    return tq


def sa_block(c, s, params, *, compute_dtype=jnp.bfloat16, tile_q=256):
    """c, s: (B, C, H, W) float32. Returns (B, C, H, W) float32.

    compute_dtype: dtype of the MXU operands (bf16 = production; f32 = exact).
    Accumulation and softmax math are always f32.
    """
    B, C, H, W = c.shape
    HW = H * W
    tq = _pick_tile_q(HW, tile_q)
    nq = HW // tq

    wc, bc, ws, bs, wi, bi, wo, bo = params
    w_stack = jnp.stack([wc, ws, wi, wo]).astype(compute_dtype)          # (4,C,C)
    b_stack = jnp.stack([bc, bs, bi, bo], axis=-1).astype(jnp.float32)   # (C,4)

    c3 = c.reshape(B, C, HW)
    s3 = s.reshape(B, C, HW)

    slab_spec = pl.BlockSpec((1, C, HW), lambda b, q: (b, 0, 0))
    w_spec = pl.BlockSpec((4, C, C), lambda b, q: (0, 0, 0))
    bias_spec = pl.BlockSpec((C, 4), lambda b, q: (0, 0))
    out_spec = pl.BlockSpec((1, C, tq), lambda b, q: (b, 0, q))

    # ---- explicit VMEM budget, sized from the tiles ----
    cds = jnp.dtype(compute_dtype).itemsize
    est = (2 * 2 * C * HW * 4            # c, s slabs, double-buffered
           + 2 * 4 * C * C * cds         # stacked weights (double-buffered)
           + 2 * C * 128 * 4             # biases (lane padded)
           + 2 * C * max(tq, 128) * 4    # output tiles
           + 3 * C * HW * cds            # cf / sf / xf scratch
           + 3 * tq * HW * 4)            # score / exp temporaries
    try:
        cap = int(pltpu.get_tpu_info().vmem_capacity_bytes)
    except Exception:
        cap = 64 << 20                   # conservative (v7x) fallback
    vmem_limit = max(min(int(est * 1.5) + (4 << 20), cap - (8 << 20)), 16 << 20)

    # advisory cost for XLA's scheduler around the custom call
    flops = B * (3 * 2 * C * C * HW        # prep 1x1 convs
                 + 2 * 2 * C * HW * HW     # two attention bmms
                 + 2 * C * C * HW)         # output 1x1 conv
    cost = pl.CostEstimate(
        flops=int(flops),
        transcendentals=int(B * HW * HW),  # exp in softmax
        bytes_accessed=int((3 * B * C * HW + 4 * C * C + 4 * C) * 4))

    out = pl.pallas_call(
        sa_block_kernel,
        out_shape=jax.ShapeDtypeStruct((B, C, HW), c.dtype),
        grid=(B, nq),
        in_specs=[slab_spec, slab_spec, w_spec, bias_spec],
        out_specs=out_spec,
        scratch_shapes=[pltpu.VMEM((C, HW), compute_dtype),
                        pltpu.VMEM((C, HW), compute_dtype),
                        pltpu.VMEM((C, HW), compute_dtype)],
        compiler_params=pltpu.CompilerParams(
            dimension_semantics=("parallel", "arbitrary"),
            vmem_limit_bytes=int(vmem_limit)),
        cost_estimate=cost,
    )(c3, s3, w_stack, b_stack)

    return out.reshape(B, C, H, W)


# ---------------------------------------------------------------------------
# pure-JAX reference (mirrors the PyTorch module exactly)
# ---------------------------------------------------------------------------
def sa_block_ref(c, s, params):
    wc, bc, ws, bs, wi, bi, wo, bo = params

    def normalizer(t):
        B, C = t.shape[:2]
        flat = t.reshape(B, C, -1)
        var = jnp.var(flat, axis=2, ddof=1) + EPS
        std = jnp.sqrt(var)[:, :, None, None]
        mean = jnp.mean(flat, axis=2)[:, :, None, None]
        return (t - mean) / std

    def conv1x1(x, w, bias):
        return jnp.einsum('oc,bchw->bohw', w, x) + bias[None, :, None, None]

    cf = conv1x1(normalizer(c), wc, bc)
    sf = conv1x1(normalizer(s), ws, bs)
    xf = conv1x1(s, wi, bi)
    B, C, H, W = c.shape
    cf = cf.reshape(B, C, H * W)
    sf = sf.reshape(B, C, H * W)
    xf = xf.reshape(B, C, H * W)
    mask = jnp.einsum('bcp,bcq->bpq', cf, sf)           # bmm(cf^T, sf)
    mask = jax.nn.softmax(mask, axis=-1)
    of = jnp.einsum('bcq,bpq->bcp', xf, mask)           # bmm(xf, mask^T)
    of = of.reshape(B, C, H, W)
    of = conv1x1(of, wo, bo) + c
    return of


def make_params(key, channels):
    keys = jax.random.split(key, 8)
    scale = 1.0 / jnp.sqrt(channels)
    wc = jax.random.normal(keys[0], (channels, channels), jnp.float32) * scale
    bc = jax.random.normal(keys[1], (channels,), jnp.float32) * 0.1
    ws = jax.random.normal(keys[2], (channels, channels), jnp.float32) * scale
    bs = jax.random.normal(keys[3], (channels,), jnp.float32) * 0.1
    wi = jax.random.normal(keys[4], (channels, channels), jnp.float32) * scale
    bi = jax.random.normal(keys[5], (channels,), jnp.float32) * 0.1
    wo = jax.random.normal(keys[6], (channels, channels), jnp.float32) * scale
    bo = jax.random.normal(keys[7], (channels,), jnp.float32) * 0.1
    return (wc, bc, ws, bs, wi, bi, wo, bo)


if __name__ == "__main__":
    B, C, H, W = 2, 8, 16, 16
    key = jax.random.PRNGKey(0)
    kc, ks, kp = jax.random.split(key, 3)
    c = jax.random.normal(kc, (B, C, H, W), jnp.float32)
    s = jax.random.normal(ks, (B, C, H, W), jnp.float32)
    params = make_params(kp, C)

    ref = jax.block_until_ready(sa_block_ref(c, s, params))

    # exact path (f32 MXU operands): tight check, tile_q=128 -> 2 query tiles
    out_f32 = jax.block_until_ready(
        sa_block(c, s, params, compute_dtype=jnp.float32, tile_q=128))
    assert out_f32.shape == (B, C, H, W)
    max_err = float(jnp.max(jnp.abs(out_f32 - ref)))
    assert jnp.allclose(out_f32, ref, atol=2e-4, rtol=2e-4), max_err

    # production path (bf16 MXU operands, f32 accumulation/softmax): loose check
    out_bf16 = jax.block_until_ready(
        sa_block(c, s, params, compute_dtype=jnp.bfloat16, tile_q=128))
    rel = float(jnp.linalg.norm((out_bf16 - ref).astype(jnp.float32))
                / jnp.linalg.norm(ref))
    assert rel < 2e-2, rel

    print("KERNEL_OK")
</pallas_src>

<mosaic_0001>
module attributes {stable_mosaic.version = 11 : i64} {
  func.func @sa_block_kernel(%arg0: i32, %arg1: i32, %arg2: memref<1x8x256xf32, #tpu.memory_space<vmem>>, %arg3: memref<1x8x256xf32, #tpu.memory_space<vmem>>, %arg4: memref<4x8x8xf32, #tpu.memory_space<vmem>>, %arg5: memref<8x4xf32, #tpu.memory_space<vmem>>, %arg6: memref<1x8x128xf32, #tpu.memory_space<vmem>>, %arg7: memref<8x256xf32, #tpu.memory_space<vmem>>, %arg8: memref<8x256xf32, #tpu.memory_space<vmem>>, %arg9: memref<8x256xf32, #tpu.memory_space<vmem>>) attributes {dimension_semantics = [#tpu.dimension_semantics<parallel>, #tpu.dimension_semantics<arbitrary>], iteration_bounds = array<i64: 2, 2>, scalar_prefetch = 0 : i64, scratch_operands = 3 : i64, tpu.core_type = #tpu.core_type<tc>, window_params = [{transform_indices = @transform_0, window_bounds = array<i64: 1, 8, 256>}, {transform_indices = @transform_1, window_bounds = array<i64: 1, 8, 256>}, {pipeline_mode = #tpu.pipeline_mode<synchronous>, transform_indices = @transform_2, window_bounds = array<i64: 4, 8, 8>}, {pipeline_mode = #tpu.pipeline_mode<synchronous>, transform_indices = @transform_3, window_bounds = array<i64: 8, 4>}, {transform_indices = @transform_4, window_bounds = array<i64: 1, 8, 128>}]} {
    %c0_i32 = arith.constant 0 : i32
    %0 = arith.cmpi eq, %arg1, %c0_i32 : i32
    %1 = arith.extui %0 : i1 to i32
    %c0_i32_0 = arith.constant 0 : i32
    %2 = arith.cmpi ne, %1, %c0_i32_0 : i32
    scf.if %2 {
      %c0_19 = arith.constant 0 : index
      %c0_20 = arith.constant 0 : index
      %c0_21 = arith.constant 0 : index
      %38 = vector.load %arg2[%c0_19, %c0_20, %c0_21] : memref<1x8x256xf32, #tpu.memory_space<vmem>>, vector<1x8x256xf32>
      %39 = vector.shape_cast %38 : vector<1x8x256xf32> to vector<8x256xf32>
      %c0_22 = arith.constant 0 : index
      %c0_23 = arith.constant 0 : index
      %c0_24 = arith.constant 0 : index
      %40 = vector.load %arg3[%c0_22, %c0_23, %c0_24] : memref<1x8x256xf32, #tpu.memory_space<vmem>>, vector<1x8x256xf32>
      %41 = vector.shape_cast %40 : vector<1x8x256xf32> to vector<8x256xf32>
      %cst_25 = arith.constant dense<0.000000e+00> : vector<8xf32>
      %42 = vector.multi_reduction <add>, %39, %cst_25 [1] : vector<8x256xf32> to vector<8xf32>
      %43 = vector.shape_cast %42 : vector<8xf32> to vector<8x1xf32>
      %cst_26 = arith.constant 2.560000e+02 : f32
      %44 = vector.broadcast %cst_26 : f32 to vector<8x1xf32>
      %45 = arith.divf %43, %44 : vector<8x1xf32>
      %46 = vector.broadcast %45 : vector<8x1xf32> to vector<8x256xf32>
      %47 = arith.subf %39, %46 : vector<8x256xf32>
      %48 = arith.mulf %47, %47 : vector<8x256xf32>
      %cst_27 = arith.constant dense<0.000000e+00> : vector<8xf32>
      %49 = vector.multi_reduction <add>, %48, %cst_27 [1] : vector<8x256xf32> to vector<8xf32>
      %50 = vector.shape_cast %49 : vector<8xf32> to vector<8x1xf32>
      %cst_28 = arith.constant 0.00392156886 : f32
      %51 = vector.broadcast %cst_28 : f32 to vector<8x1xf32>
      %52 = arith.mulf %50, %51 : vector<8x1xf32>
      %cst_29 = arith.constant 9.99999974E-6 : f32
      %53 = vector.broadcast %cst_29 : f32 to vector<8x1xf32>
      %54 = arith.addf %52, %53 : vector<8x1xf32>
      %55 = math.rsqrt %54 : vector<8x1xf32>
      %56 = vector.broadcast %55 : vector<8x1xf32> to vector<8x256xf32>
      %57 = arith.mulf %47, %56 : vector<8x256xf32>
      %cst_30 = arith.constant dense<0.000000e+00> : vector<8xf32>
      %58 = vector.multi_reduction <add>, %41, %cst_30 [1] : vector<8x256xf32> to vector<8xf32>
      %59 = vector.shape_cast %58 : vector<8xf32> to vector<8x1xf32>
      %cst_31 = arith.constant 2.560000e+02 : f32
      %60 = vector.broadcast %cst_31 : f32 to vector<8x1xf32>
      %61 = arith.divf %59, %60 : vector<8x1xf32>
      %62 = vector.broadcast %61 : vector<8x1xf32> to vector<8x256xf32>
      %63 = arith.subf %41, %62 : vector<8x256xf32>
      %64 = arith.mulf %63, %63 : vector<8x256xf32>
      %cst_32 = arith.constant dense<0.000000e+00> : vector<8xf32>
      %65 = vector.multi_reduction <add>, %64, %cst_32 [1] : vector<8x256xf32> to vector<8xf32>
      %66 = vector.shape_cast %65 : vector<8xf32> to vector<8x1xf32>
      %cst_33 = arith.constant 0.00392156886 : f32
      %67 = vector.broadcast %cst_33 : f32 to vector<8x1xf32>
      %68 = arith.mulf %66, %67 : vector<8x1xf32>
      %cst_34 = arith.constant 9.99999974E-6 : f32
      %69 = vector.broadcast %cst_34 : f32 to vector<8x1xf32>
      %70 = arith.addf %68, %69 : vector<8x1xf32>
      %71 = math.rsqrt %70 : vector<8x1xf32>
      %72 = vector.broadcast %71 : vector<8x1xf32> to vector<8x256xf32>
      %73 = arith.mulf %63, %72 : vector<8x256xf32>
      %c0_35 = arith.constant 0 : index
      %c0_36 = arith.constant 0 : index
      %c0_37 = arith.constant 0 : index
      %74 = vector.load %arg4[%c0_35, %c0_36, %c0_37] : memref<4x8x8xf32, #tpu.memory_space<vmem>>, vector<1x8x8xf32>
      %75 = vector.shape_cast %74 : vector<1x8x8xf32> to vector<8x8xf32>
      %cst_38 = arith.constant dense<0.000000e+00> : vector<8x256xf32>
      %76 = tpu.matmul %75, %57, %cst_38 {dimension_numbers = #tpu.dot_dimension_numbers<[1], [0], [0], [1], [0, 0, 1, 1], [], []>} : vector<8x8xf32>, vector<8x256xf32>, vector<8x256xf32> -> vector<8x256xf32>
      %c0_39 = arith.constant 0 : index
      %c0_40 = arith.constant 0 : index
      %77 = vector.load %arg5[%c0_39, %c0_40] : memref<8x4xf32, #tpu.memory_space<vmem>>, vector<8x1xf32>
      %78 = vector.broadcast %77 : vector<8x1xf32> to vector<8x256xf32>
      %79 = arith.addf %76, %78 : vector<8x256xf32>
      %c1 = arith.constant 1 : index
      %c0_41 = arith.constant 0 : index
      %c0_42 = arith.constant 0 : index
      %80 = vector.load %arg4[%c1, %c0_41, %c0_42] : memref<4x8x8xf32, #tpu.memory_space<vmem>>, vector<1x8x8xf32>
      %81 = vector.shape_cast %80 : vector<1x8x8xf32> to vector<8x8xf32>
      %cst_43 = arith.constant dense<0.000000e+00> : vector<8x256xf32>
      %82 = tpu.matmul %81, %73, %cst_43 {dimension_numbers = #tpu.dot_dimension_numbers<[1], [0], [0], [1], [0, 0, 1, 1], [], []>} : vector<8x8xf32>, vector<8x256xf32>, vector<8x256xf32> -> vector<8x256xf32>
      %c0_44 = arith.constant 0 : index
      %c1_45 = arith.constant 1 : index
      %83 = vector.load %arg5[%c0_44, %c1_45] : memref<8x4xf32, #tpu.memory_space<vmem>>, vector<8x1xf32>
      %84 = vector.broadcast %83 : vector<8x1xf32> to vector<8x256xf32>
      %85 = arith.addf %82, %84 : vector<8x256xf32>
      %c2 = arith.constant 2 : index
      %c0_46 = arith.constant 0 : index
      %c0_47 = arith.constant 0 : index
      %86 = vector.load %arg4[%c2, %c0_46, %c0_47] : memref<4x8x8xf32, #tpu.memory_space<vmem>>, vector<1x8x8xf32>
      %87 = vector.shape_cast %86 : vector<1x8x8xf32> to vector<8x8xf32>
      %cst_48 = arith.constant dense<0.000000e+00> : vector<8x256xf32>
      %88 = tpu.matmul %87, %41, %cst_48 {dimension_numbers = #tpu.dot_dimension_numbers<[1], [0], [0], [1], [0, 0, 1, 1], [], []>} : vector<8x8xf32>, vector<8x256xf32>, vector<8x256xf32> -> vector<8x256xf32>
      %c0_49 = arith.constant 0 : index
      %c2_50 = arith.constant 2 : index
      %89 = vector.load %arg5[%c0_49, %c2_50] : memref<8x4xf32, #tpu.memory_space<vmem>>, vector<8x1xf32>
      %90 = vector.broadcast %89 : vector<8x1xf32> to vector<8x256xf32>
      %91 = arith.addf %88, %90 : vector<8x256xf32>
      %c0_51 = arith.constant 0 : index
      %c0_52 = arith.constant 0 : index
      %92 = vector.load %arg7[%c0_51, %c0_52] : memref<8x256xf32, #tpu.memory_space<vmem>>, vector<8x256xf32>
      tpu.vector_store %arg7[%c0_51, %c0_52], %79 {strides = array<i32>} : memref<8x256xf32, #tpu.memory_space<vmem>>, vector<8x256xf32>,
      %c0_53 = arith.constant 0 : index
      %c0_54 = arith.constant 0 : index
      %93 = vector.load %arg8[%c0_53, %c0_54] : memref<8x256xf32, #tpu.memory_space<vmem>>, vector<8x256xf32>
      tpu.vector_store %arg8[%c0_53, %c0_54], %85 {strides = array<i32>} : memref<8x256xf32, #tpu.memory_space<vmem>>, vector<8x256xf32>,
      %c0_55 = arith.constant 0 : index
      %c0_56 = arith.constant 0 : index
      %94 = vector.load %arg9[%c0_55, %c0_56] : memref<8x256xf32, #tpu.memory_space<vmem>>, vector<8x256xf32>
      tpu.vector_store %arg9[%c0_55, %c0_56], %91 {strides = array<i32>} : memref<8x256xf32, #tpu.memory_space<vmem>>, vector<8x256xf32>,
    } else {
    }
    %c128_i32 = arith.constant 128 : i32
    %3 = arith.muli %arg1, %c128_i32 : i32
    %4 = tpu.assume_multiple %3, 128 : i32
    %c0 = arith.constant 0 : index
    %5 = arith.index_cast %4 : i32 to index
    %6 = vector.load %arg7[%c0, %5] : memref<8x256xf32, #tpu.memory_space<vmem>>, vector<8x128xf32>
    %c0_1 = arith.constant 0 : index
    %c0_2 = arith.constant 0 : index
    %7 = vector.load %arg8[%c0_1, %c0_2] : memref<8x256xf32, #tpu.memory_space<vmem>>, vector<8x256xf32>
    %cst = arith.constant dense<0.000000e+00> : vector<128x256xf32>
    %8 = tpu.matmul %6, %7, %cst {dimension_numbers = #tpu.dot_dimension_numbers<[0], [0], [1], [1], [0, 1, 1, 1], [], []>} : vector<8x128xf32>, vector<8x256xf32>, vector<128x256xf32> -> vector<128x256xf32>
    %cst_3 = arith.constant dense<0xFF800000> : vector<128xf32>
    %9 = vector.multi_reduction <maximumf>, %8, %cst_3 [1] : vector<128x256xf32> to vector<128xf32>
    %10 = vector.shape_cast %9 : vector<128xf32> to vector<128x1xf32>
    %11 = vector.broadcast %10 : vector<128x1xf32> to vector<128x256xf32>
    %12 = arith.subf %8, %11 : vector<128x256xf32>
    %13 = math.exp %12 : vector<128x256xf32>
    %cst_4 = arith.constant dense<0.000000e+00> : vector<128xf32>
    %14 = vector.multi_reduction <add>, %13, %cst_4 [1] : vector<128x256xf32> to vector<128xf32>
    %15 = vector.shape_cast %14 : vector<128xf32> to vector<128x1xf32>
    %16 = tpu.reciprocal %15 {approx = true} : vector<128x1xf32> -> vector<128x1xf32>
    %17 = arith.mulf %15, %16 : vector<128x1xf32>
    %cst_5 = arith.constant 2.000000e+00 : f32
    %18 = vector.broadcast %cst_5 : f32 to vector<128x1xf32>
    %19 = arith.subf %18, %17 : vector<128x1xf32>
    %20 = arith.mulf %16, %19 : vector<128x1xf32>
    %21 = vector.broadcast %20 : vector<128x1xf32> to vector<128x256xf32>
    %22 = arith.mulf %13, %21 : vector<128x256xf32>
    %c0_6 = arith.constant 0 : index
    %c0_7 = arith.constant 0 : index
    %23 = vector.load %arg9[%c0_6, %c0_7] : memref<8x256xf32, #tpu.memory_space<vmem>>, vector<8x256xf32>
    %cst_8 = arith.constant dense<0.000000e+00> : vector<8x128xf32>
    %24 = tpu.matmul %23, %22, %cst_8 {dimension_numbers = #tpu.dot_dimension_numbers<[1], [1], [0], [0], [0, 0, 1, 0], [], []>} : vector<8x256xf32>, vector<128x256xf32>, vector<8x128xf32> -> vector<8x128xf32>
    %c3 = arith.constant 3 : index
    %c0_9 = arith.constant 0 : index
    %c0_10 = arith.constant 0 : index
    %25 = vector.load %arg4[%c3, %c0_9, %c0_10] : memref<4x8x8xf32, #tpu.memory_space<vmem>>, vector<1x8x8xf32>
    %26 = vector.shape_cast %25 : vector<1x8x8xf32> to vector<8x8xf32>
    %cst_11 = arith.constant dense<0.000000e+00> : vector<8x128xf32>
    %27 = tpu.matmul %26, %24, %cst_11 {dimension_numbers = #tpu.dot_dimension_numbers<[1], [0], [0], [1], [0, 0, 1, 1], [], []>} : vector<8x8xf32>, vector<8x128xf32>, vector<8x128xf32> -> vector<8x128xf32>
    %c0_12 = arith.constant 0 : index
    %c3_13 = arith.constant 3 : index
    %28 = vector.load %arg5[%c0_12, %c3_13] : memref<8x4xf32, #tpu.memory_space<vmem>>, vector<8x1xf32>
    %29 = vector.broadcast %28 : vector<8x1xf32> to vector<8x128xf32>
    %30 = arith.addf %27, %29 : vector<8x128xf32>
    %c0_14 = arith.constant 0 : index
    %c0_15 = arith.constant 0 : index
    %31 = arith.index_cast %4 : i32 to index
    %32 = vector.load %arg2[%c0_14, %c0_15, %31] : memref<1x8x256xf32, #tpu.memory_space<vmem>>, vector<1x8x128xf32>
    %33 = vector.shape_cast %32 : vector<1x8x128xf32> to vector<8x128xf32>
    %34 = arith.addf %30, %33 : vector<8x128xf32>
    %c0_16 = arith.constant 0 : index
    %c0_17 = arith.constant 0 : index
    %c0_18 = arith.constant 0 : index
    %35 = vector.load %arg6[%c0_16, %c0_17, %c0_18] : memref<1x8x128xf32, #tpu.memory_space<vmem>>, vector<1x8x128xf32>
    %36 = vector.shape_cast %35 : vector<1x8x128xf32> to vector<8x128xf32>
    %37 = vector.shape_cast %34 : vector<8x128xf32> to vector<1x8x128xf32>
    tpu.vector_store %arg6[%c0_16, %c0_17, %c0_18], %37 {strides = array<i32>} : memref<1x8x128xf32, #tpu.memory_space<vmem>>, vector<1x8x128xf32>,
    return
  }
  func.func @transform_0(%arg0: i32, %arg1: i32) -> (i32, i32, i32) {
    %c0_i32 = arith.constant 0 : i32
    %c0_i32_0 = arith.constant 0 : i32
    %c0_i32_1 = arith.constant 0 : i32
    return %arg0, %c0_i32, %c0_i32_0 : i32, i32, i32
  }
  func.func @transform_1(%arg0: i32, %arg1: i32) -> (i32, i32, i32) {
    %c0_i32 = arith.constant 0 : i32
    %c0_i32_0 = arith.constant 0 : i32
    %c0_i32_1 = arith.constant 0 : i32
    return %arg0, %c0_i32, %c0_i32_0 : i32, i32, i32
  }
  func.func @transform_2(%arg0: i32, %arg1: i32) -> (i32, i32, i32) {
    %c0_i32 = arith.constant 0 : i32
    %c0_i32_0 = arith.constant 0 : i32
    %c0_i32_1 = arith.constant 0 : i32
    %c0_i32_2 = arith.constant 0 : i32
    return %c0_i32, %c0_i32_0, %c0_i32_1 : i32, i32, i32
  }
  func.func @transform_3(%arg0: i32, %arg1: i32) -> (i32, i32) {
    %c0_i32 = arith.constant 0 : i32
    %c0_i32_0 = arith.constant 0 : i32
    %c0_i32_1 = arith.constant 0 : i32
    return %c0_i32, %c0_i32_0 : i32, i32
  }
  func.func @transform_4(%arg0: i32, %arg1: i32) -> (i32, i32, i32) {
    %c0_i32 = arith.constant 0 : i32
    %c0_i32_0 = arith.constant 0 : i32
    return %arg0, %c0_i32, %arg1 : i32, i32, i32
  }
}

</mosaic_0001>

<llo_original>
// kernel: tpu_custom_call.1
$region0: #{tpu_custom_call.1}
  #allocation0 [shape = 'u32[]', space=smem, size = 0x4, offset = 0x4, fixed_abs, tag = 'smem constant byte address 0x4 - core index']
  #allocation1 [shape = 'u32[72,128]{1,0:T(1,128)}', space=vmem, size = 0x9000, scoped, tag = 'internal scratch']
  #allocation2 [shape = 'f32[8,256]{1,0:T(8,128)}', space=vmem, size = 0x2000, scoped, tag = 'scratch operand']
  #allocation3 [shape = 'f32[8,256]{1,0:T(8,128)}', space=vmem, size = 0x2000, scoped, tag = 'scratch operand']
  #allocation4 [shape = 'f32[8,256]{1,0:T(8,128)}', space=vmem, size = 0x2000, scoped, tag = 'scratch operand']
  %s0 = inlined_call_operand.hbm [shape: f32[2,8,256], index: 0, kind: input, shape index: {}]
  %s1 = inlined_call_operand.hbm [shape: f32[2,8,256], index: 1, kind: input, shape index: {}]
  %s2 = inlined_call_operand.hbm [shape: f32[4,8,8], index: 2, kind: input, shape index: {}]
  %s3 = inlined_call_operand.vmem [shape: f32[8,4], index: 3, kind: input, shape index: {}]
  %s4 = inlined_call_operand.hbm [shape: f32[2,8,256], index: 4, kind: output, shape index: {}]
  %s5 = sld [smem:[#allocation0]]
  $region65: #{tpu_custom_call.1} parent=0
    _
  %s7 = ssub.s32 1, %s5
  %s8 = scalar_select 0, %s7, %s5
  $region1: #{tpu_custom_call.1} parent=0
    #allocation5 [shape = 'u8[16384]{0}', space=vmem, size = 0x4000, scoped, tag = 'input window, operand 0']
    #allocation6 [shape = 's32[2]{0}', space=sflag, size = 0x8, scoped, tag = 'scoped memory for tpu_custom_call.1']
    #allocation7 [shape = 's32[2]{0}', space=sflag, size = 0x8, scoped, tag = 'scoped memory for tpu_custom_call.1']
    #allocation8 [shape = 'u8[16384]{0}', space=vmem, size = 0x4000, scoped, tag = 'input window, operand 1']
    #allocation9 [shape = 's32[2]{0}', space=sflag, size = 0x8, scoped, tag = 'scoped memory for tpu_custom_call.1']
    #allocation10 [shape = 'u8[16384]{0}', space=vmem, size = 0x4000, scoped, tag = 'input window, operand 2, single buffered']
    #allocation11 [shape = 'u8[8192]{0}', space=vmem, size = 0x2000, scoped, tag = 'output window, operand 0']
    %9 = vsyncpa [#allocation6], 0
    %s10 = scalar_lea.sflag [#allocation6], 1
    %11 = vsyncpa %s10, 0
    %12 = vsyncpa [#allocation9], 0
    %s13 = scalar_lea.sflag [#allocation9], 1
    %14 = vsyncpa %s13, 0
    %15 = vsyncpa [#allocation7], 0
    %s16 = scalar_lea.sflag [#allocation7], 1
    %17 = vsyncpa %s16, 0
    loop: start=0, step=1, limit=6
    $region2: #{tpu_custom_call.1} parent=1 // loop_pre_header
      _
    $region3: #{tpu_custom_call.1} parent=1 // loop_header
      %s19 = sphi 0, %s23
      %p20 = scmp.ge.s32.totalorder %s19, 6
      %s26 = sphi 0, %s38
      %s27 = sphi 0, %s34
      %s28 = sphi 0, %s26
      %s29 = sphi 0, %s27
      %s30 = sphi 0, %s28
      %s31 = sphi 0, %s29
      %s41 = sphi 0, %s43
      %s44 = sphi 0, %s41
      %s45 = sphi 0, %s44
      %s61 = sphi 0, %s45
      %s67 = sphi 0, %s69
      %s70 = sphi 0, %s67
      %s71 = sphi 0, %s70
      %s87 = sphi 0, %s71
      %s91 = sphi 0, %s91
      %s93 = sphi 0, %s91
      %s94 = sphi 0, %s93
      %s108 = sphi 0, %s94
      %s112 = sphi 0, %s112
      %s114 = sphi 0, %s112
      %s115 = sphi 0, %s114
      %s129 = sphi 0, %s115
      %s137 = sphi 0, %s139
      %s140 = sphi 0, %s137
      %s141 = sphi 0, %s140
      %s157 = sphi 0, %s141
    $region4: #{tpu_custom_call.1} parent=1 // loop_header_branch
      %22 = sbr.rel (%p20) target = $region8
    $region5: #{tpu_custom_call.1} parent=1 // loop_body
      %s24 = ssub.s32 %s19, 1
      %s25 = ssub.s32 %s19, 2
      %s32 = sadd.s32 1, %s27
      %p33 = scmp.ge.s32.totalorder %s32, 2
      %s34 = scalar_select %p33, 0, %s32
      %s35 = sadd.s32 1, %s26
      %s36 = scalar_select %p33, %s35, %s26
      %p37 = scmp.ge.s32.totalorder %s36, 2
      %s38 = scalar_select %p37, 0, %s36
      %s39 = ssub.s32 %s26, %s38
      %p40 = scmp.eq.s32.totalorder %s39, 0
      %s42 = sadd.s32 %s41, 1
      %s43 = scalar_select %p40, %s41, %s42
      %p46 = pneg %p40
      %p47 = scmp.eq.s32.totalorder %s19, 3
      %p48 = por %p46, %p47
      %p49 = scmp.ne.s32.totalorder %s41, %s44
      %p50 = scmp.eq.s32.totalorder %s19, 0
      %p51 = por %p49, %p50
      %p52 = scmp.ne.s32.totalorder %s41, %s44
      %p53 = scmp.eq.s32.totalorder %s24, 3
      %p54 = por %p52, %p53
      %p55 = scmp.ne.s32.totalorder %s44, %s45
      %p56 = scmp.eq.s32.totalorder %s24, 0
      %p57 = por %p55, %p56
      %p58 = scmp.ne.s32.totalorder %s44, %s45
      %p59 = scmp.eq.s32.totalorder %s25, 3
      %p60 = por %p58, %p59
      %p62 = scmp.ne.s32.totalorder %s45, %s61
      %p63 = scmp.eq.s32.totalorder %s25, 0
      %p64 = por %p62, %p63
      %s65 = ssub.s32 %s26, %s38
      %p66 = scmp.eq.s32.totalorder %s65, 0
      %s68 = sadd.s32 %s67, 1
      %s69 = scalar_select %p66, %s67, %s68
      %p72 = pneg %p66
      %p73 = scmp.eq.s32.totalorder %s19, 3
      %p74 = por %p72, %p73
      %p75 = scmp.ne.s32.totalorder %s67, %s70
      %p76 = scmp.eq.s32.totalorder %s19, 0
      %p77 = por %p75, %p76
      %p78 = scmp.ne.s32.totalorder %s67, %s70
      %p79 = scmp.eq.s32.totalorder %s24, 3
      %p80 = por %p78, %p79
      %p81 = scmp.ne.s32.totalorder %s70, %s71
      %p82 = scmp.eq.s32.totalorder %s24, 0
      %p83 = por %p81, %p82
      %p84 = scmp.ne.s32.totalorder %s70, %s71
      %p85 = scmp.eq.s32.totalorder %s25, 3
      %p86 = por %p84, %p85
      %p88 = scmp.ne.s32.totalorder %s71, %s87
      %p89 = scmp.eq.s32.totalorder %s25, 0
      %p90 = por %p88, %p89
      %s92 = sadd.s32 %s91, 1
      %p95 = scmp.eq.s32.totalorder %s19, 3
      %p96 = scmp.ne.s32.totalorder %s91, %s93
      %p97 = scmp.eq.s32.totalorder %s19, 0
      %p98 = por %p96, %p97
      %p99 = scmp.ne.s32.totalorder %s91, %s93
      %p100 = scmp.eq.s32.totalorder %s24, 3
      %p101 = por %p99, %p100
      %p102 = scmp.ne.s32.totalorder %s93, %s94
      %p103 = scmp.eq.s32.totalorder %s24, 0
      %p104 = por %p102, %p103
      %p105 = scmp.ne.s32.totalorder %s93, %s94
      %p106 = scmp.eq.s32.totalorder %s25, 3
      %p107 = por %p105, %p106
      %p109 = scmp.ne.s32.totalorder %s94, %s108
      %p110 = scmp.eq.s32.totalorder %s25, 0
      %p111 = por %p109, %p110
      %s113 = sadd.s32 %s112, 1
      %p116 = scmp.eq.s32.totalorder %s19, 3
      %p117 = scmp.ne.s32.totalorder %s112, %s114
      %p118 = scmp.eq.s32.totalorder %s19, 0
      %p119 = por %p117, %p118
      %p120 = scmp.ne.s32.totalorder %s112, %s114
      %p121 = scmp.eq.s32.totalorder %s24, 3
      %p122 = por %p120, %p121
      %p123 = scmp.ne.s32.totalorder %s114, %s115
      %p124 = scmp.eq.s32.totalorder %s24, 0
      %p125 = por %p123, %p124
      %p126 = scmp.ne.s32.totalorder %s114, %s115
      %p127 = scmp.eq.s32.totalorder %s25, 3
      %p128 = por %p126, %p127
      %p130 = scmp.ne.s32.totalorder %s115, %s129
      %p131 = scmp.eq.s32.totalorder %s25, 0
      %p132 = por %p130, %p131
      %s133 = ssub.s32 %s26, %s38
      %s134 = ssub.s32 %s27, %s34
      %s135 = sor.u32 %s133, %s134
      %p136 = scmp.eq.s32.totalorder %s135, 0
      %s138 = sadd.s32 %s137, 1
      %s139 = scalar_select %p136, %s137, %s138
      %p142 = pneg %p136
      %p143 = scmp.eq.s32.totalorder %s19, 3
      %p144 = por %p142, %p143
      %p145 = scmp.ne.s32.totalorder %s137, %s140
      %p146 = scmp.eq.s32.totalorder %s19, 0
      %p147 = por %p145, %p146
      %p148 = scmp.ne.s32.totalorder %s137, %s140
      %p149 = scmp.eq.s32.totalorder %s24, 3
      %p150 = por %p148, %p149
      %p151 = scmp.ne.s32.totalorder %s140, %s141
      %p152 = scmp.eq.s32.totalorder %s24, 0
      %p153 = por %p151, %p152
      %p154 = scmp.ne.s32.totalorder %s140, %s141
      %p155 = scmp.eq.s32.totalorder %s25, 3
      %p156 = por %p154, %p155
      %p158 = scmp.ne.s32.totalorder %s141, %s157
      %p159 = scmp.eq.s32.totalorder %s25, 0
      %p160 = por %p158, %p159
      %p161 = scmp.le.s32.totalorder 1, %s19
      %p162 = scmp.lt.s32.totalorder %s19, 5
      %p163 = pnand %p161, %p162
      %p164 = pneg %p163
      // Predicated region
      $region9: #{tpu_custom_call.1} parent=5 // pred_check
        _
      $region10: #{tpu_custom_call.1} parent=5 // pred_check_branch
        %166 = sbr.rel (%p163) target = $region12
      $region11: #{tpu_custom_call.1} parent=5 // pred_region
        %s167 = ssub.s32 %s19, 1
        // Predicated region
        $region13: #{tpu_custom_call.1} parent=11 // pred_check
          %p168 = pneg %p104
        $region14: #{tpu_custom_call.1} parent=11 // pred_check_branch
          %170 = sbr.rel (%p168) target = $region16
        $region15: #{tpu_custom_call.1} parent=11 // pred_region
          %172 = vsyncadd [#allocation9], 0
          %s173 = sshll.u32 %s2, 4
          %s174 = int_to_ptr.hbm [resolvable:$true] %s173
          %s175 = sshll.u32 [#allocation10], 4
          %s176 = int_to_ptr.vmem [resolvable:$true] %s175
          %181 = dma.hbm_to_vmem [thread:$0]  %s174, 512, %s176, [#allocation9], 128, 128, 8
        $region16: #{tpu_custom_call.1} parent=11 // pred_fallthru
          _
        // Predicated region
        $region17: #{tpu_custom_call.1} parent=11 // pred_check
          %p182 = pneg %p125
        $region18: #{tpu_custom_call.1} parent=11 // pred_check_branch
          %184 = sbr.rel (%p182) target = $region20
        $region19: #{tpu_custom_call.1} parent=11 // pred_region
          _
        $region20: #{tpu_custom_call.1} parent=11 // pred_fallthru
          _
      $region12: #{tpu_custom_call.1} parent=5 // pred_fallthru
        _
      %p185 = scmp.lt.s32.totalorder %s19, 4
      // Predicated region
      $region21: #{tpu_custom_call.1} parent=5 // pred_check
        %p186 = pneg %p185
      $region22: #{tpu_custom_call.1} parent=5 // pred_check_branch
        %188 = sbr.rel (%p186) target = $region24
      $region23: #{tpu_custom_call.1} parent=5 // pred_region
        // Predicated region
        $region25: #{tpu_custom_call.1} parent=23 // pred_check
          %p189 = pneg %p51
        $region26: #{tpu_custom_call.1} parent=23 // pred_check_branch
          %191 = sbr.rel (%p189) target = $region28
        $region27: #{tpu_custom_call.1} parent=23 // pred_region
          %s192 = sand.u32 %s41, 1
          %s193 = scalar_lea.sflag [#allocation6], %s192
          %s194 = sand.u32 %s41, 1
          %s195 = smul.addr %s194, 16
          %s196 = scalar_lea.vmem [#allocation5], %s195
          %198 = vsyncadd %s193, 0
          %s199 = smul.addr %s26, 2
          %s200 = smul.addr %s199, 8
          %s201 = scalar_lea.hbm %s0, %s200
          %s203 = sshll.u32 %s201, 4
          %s204 = int_to_ptr.hbm [resolvable:$true] %s203
          %s205 = sshll.u32 %s196, 4
          %s206 = int_to_ptr.vmem [resolvable:$true] %s205
          %208 = dma.hbm_to_vmem [thread:$0]  %s204, 256, %s206, %s193
        $region28: #{tpu_custom_call.1} parent=23 // pred_fallthru
          _
        // Predicated region
        $region29: #{tpu_custom_call.1} parent=23 // pred_check
          %p209 = pneg %p77
        $region30: #{tpu_custom_call.1} parent=23 // pred_check_branch
          %211 = sbr.rel (%p209) target = $region32
        $region31: #{tpu_custom_call.1} parent=23 // pred_region
          %s212 = sand.u32 %s19, 1
          %s213 = scalar_lea.sflag [#allocation9], %s212
          %s214 = sand.u32 %s67, 1
          %s215 = smul.addr %s214, 16
          %s216 = scalar_lea.vmem [#allocation8], %s215
          %218 = vsyncadd %s213, 0
          %s219 = smul.addr %s26, 2
          %s220 = smul.addr %s219, 8
          %s221 = scalar_lea.hbm %s1, %s220
          %s223 = sshll.u32 %s221, 4
          %s224 = int_to_ptr.hbm [resolvable:$true] %s223
          %s225 = sshll.u32 %s216, 4
          %s226 = int_to_ptr.vmem [resolvable:$true] %s225
          %228 = dma.hbm_to_vmem [thread:$0]  %s224, 256, %s226, %s213
        $region32: #{tpu_custom_call.1} parent=23 // pred_fallthru
          _
      $region24: #{tpu_custom_call.1} parent=5 // pred_fallthru
        _
      %p229 = scmp.le.s32.totalorder 1, %s19
      %p230 = scmp.lt.s32.totalorder %s19, 5
      %p231 = pnand %p229, %p230
      %p232 = pneg %p231
      // Predicated region
      $region33: #{tpu_custom_call.1} parent=5 // pred_check
        _
      $region34: #{tpu_custom_call.1} parent=5 // pred_check_branch
        %234 = sbr.rel (%p231) target = $region36
      $region35: #{tpu_custom_call.1} parent=5 // pred_region
        %s235 = ssub.s32 %s19, 1
        %s236 = sand.u32 %s44, 1
        %s237 = scalar_lea.sflag [#allocation6], %s236
        %s238 = sand.u32 %s44, 1
        %s239 = smul.addr %s238, 16
        %s240 = scalar_lea.vmem [#allocation5], %s239
        // Predicated region
        $region37: #{tpu_custom_call.1} parent=35 // pred_check
          %p241 = pneg %p57
        $region38: #{tpu_custom_call.1} parent=35 // pred_check_branch
          %243 = sbr.rel (%p241) target = $region40
        $region39: #{tpu_custom_call.1} parent=35 // pred_region
          %245 = dma.done %s237, 256
        $region40: #{tpu_custom_call.1} parent=35 // pred_fallthru
          _
        %s246 = sand.u32 %s24, 1
        %s247 = scalar_lea.sflag [#allocation9], %s246
        %s248 = sand.u32 %s70, 1
        %s249 = smul.addr %s248, 16
        %s250 = scalar_lea.vmem [#allocation8], %s249
        // Predicated region
        $region41: #{tpu_custom_call.1} parent=35 // pred_check
          %p251 = pneg %p83
        $region42: #{tpu_custom_call.1} parent=35 // pred_check_branch
          %253 = sbr.rel (%p251) target = $region44
        $region43: #{tpu_custom_call.1} parent=35 // pred_region
          %255 = dma.done %s247, 256
        $region44: #{tpu_custom_call.1} parent=35 // pred_fallthru
          _
        // Predicated region
        $region45: #{tpu_custom_call.1} parent=35 // pred_check
          %p256 = pneg %p104
        $region46: #{tpu_custom_call.1} parent=35 // pred_check_branch
          %258 = sbr.rel (%p256) target = $region48
        $region47: #{tpu_custom_call.1} parent=35 // pred_region
          %260 = dma.done [#allocation9], 512
        $region48: #{tpu_custom_call.1} parent=35 // pred_fallthru
          _
        %s261 = sand.u32 %s44, 1
        %s262 = scalar_lea.sflag [#allocation6], %s261
        %s263 = sand.u32 %s44, 1
        %s264 = smul.addr %s263, 16
        %s265 = scalar_lea.vmem [#allocation5], %s264
        %p266 = pneg %p57
        %p267 = pneg %p54
        %s268 = sand.u32 %s24, 1
        %s269 = scalar_lea.sflag [#allocation9], %s268
        %s270 = sand.u32 %s70, 1
        %s271 = smul.addr %s270, 16
        %s272 = scalar_lea.vmem [#allocation8], %s271
        %p273 = pneg %p83
        %p274 = pneg %p80
        %p275 = pneg %p104
        %p276 = pneg %p101
        %p277 = pneg %p125
        %p278 = pneg %p122
        %p279 = pneg %p153
        %p280 = pneg %p150
        %s281 = sand.u32 %s140, 1
        %s282 = scalar_lea.sflag [#allocation7], %s281
        %s283 = sand.u32 %s140, 1
        %s284 = smul.addr %s283, 8
        %s285 = scalar_lea.vmem [#allocation11], %s284
        %p286 = scmp.eq.s32.totalorder %s29, 0
        // Predicated region
        $region49: #{tpu_custom_call.1} parent=35 // pred_check
          %p287 = pneg %p286
        $region50: #{tpu_custom_call.1} parent=35 // pred_check_branch
          %289 = sbr.rel (%p287) target = $region52
        $region51: #{tpu_custom_call.1} parent=35 // pred_region
          %v290 = vld [vmem:[%s240] sm:$0xff]
          %v291 = vld [vmem:[%s240 + $0x8] sm:$0xff]
          %v292 = vld [vmem:[%s250] sm:$0xff]
          %v293 = vld [vmem:[%s250 + $0x8] sm:$0xff]
          %v294 = vadd.f32 %v290, %v291
          %295 = vadd.xlane.f32.xlu0 %v294
          %v296 = vpop.xlane.xlu0 %295
          %v297 = vrcp.pop 256.0
          %v298 = vmul.f32 256.0, %v297
          %v299 = vsub.f32 1.0, %v298
          %v300 = vmul.f32 %v297, %v299
          %v301 = vadd.f32 %v297, %v300
          %vm302 = vweird.f32 %v297
          %v303 = vsel %vm302, %v297, %v301
          %v304 = vmul.f32 %v296, %v303
          %v305 = vsub.f32 %v290, %v304
          %v306 = vsub.f32 %v291, %v304
          %v307 = vmul.f32 %v305, %v305
          %v308 = vmul.f32 %v306, %v306
          %v309 = vadd.f32 %v307, %v308
          %310 = vadd.xlane.f32.xlu0 %v309
          %v311 = vpop.xlane.xlu0 %310
          %v312 = vmul.f32 %v311, 0.003921569
          %v313 = vadd.f32 %v312, 1e-05
          %v314 = vrsqrt.pop %v313
          %v315 = vmul.f32 %v314, %v313
          %v316 = vmul.f32 %v315, %v314
          %v317 = vmul.f32 0.5, %v316
          %v318 = vsub.f32 1.5, %v317
          %v319 = vmul.f32 %v314, %v318
          %vm320 = vweird.f32 %v313
          %vm321 = vweird.f32 %v314
          %vm322 = vmor %vm320, %vm321
          %v323 = vsel %vm322, %v314, %v319
          %v324 = vmul.f32 %v305, %v323
          %v325 = vmul.f32 %v306, %v323
          %v326 = vadd.f32 %v292, %v293
          %327 = vadd.xlane.f32.xlu0 %v326
          %v328 = vpop.xlane.xlu0 %327
          %v329 = vmul.f32 %v328, %v303
          %v330 = vsub.f32 %v292, %v329
          %v331 = vsub.f32 %v293, %v329
          %v332 = vmul.f32 %v330, %v330
          %v333 = vmul.f32 %v331, %v331
          %v334 = vadd.f32 %v332, %v333
          %335 = vadd.xlane.f32.xlu0 %v334
          %v336 = vpop.xlane.xlu0 %335
          %v337 = vmul.f32 %v336, 0.003921569
          %v338 = vadd.f32 %v337, 1e-05
          %v339 = vrsqrt.pop %v338
          %v340 = vmul.f32 %v339, %v338
          %v341 = vmul.f32 %v340, %v339
          %v342 = vmul.f32 0.5, %v341
          %v343 = vsub.f32 1.5, %v342
          %v344 = vmul.f32 %v339, %v343
          %vm345 = vweird.f32 %v338
          %vm346 = vweird.f32 %v339
          %vm347 = vmor %vm345, %vm346
          %v348 = vsel %vm347, %v339, %v344
          %v349 = vmul.f32 %v330, %v348
          %v350 = vmul.f32 %v331, %v348
          %v351 = vld [vmem:[#allocation10] sm:$0xff]
          %v352 = vld [vmem:[%s3] sm:$0xff]
          %354 = vset.pattern.permute.xlu0 0
          %355 = vperm.xlu0 %354, %v352
          %v356 = vpop.permute.xlu0 %355
          %vm358 = vcmask 64512
          %v360 = vsel %vm358, %v351, 0
          %362 = vmatpush.msra.mxu0 0.0
          %363 = vmatpush.msra.mxu0 0.0
          %364 = vmatpush.msra.mxu0 0.0
          %365 = vmatpush.msra.mxu0 0.0
          %366 = vmatpush.msra.mxu0 0.0
          %367 = vmatpush.msra.mxu0 0.0
          %368 = vmatpush.msra.mxu0 0.0
          %369 = vmatpush.msra.mxu0 0.0
          %370 = vmatpush.msra.mxu0 0.0
          %371 = vmatpush.msra.mxu0 0.0
          %372 = vmatpush.msra.mxu0 0.0
          %373 = vmatpush.msra.mxu0 0.0
          %374 = vmatpush.msra.mxu0 0.0
          %375 = vmatpush.msra.mxu0 0.0
          %376 = vmatpush.msra.mxu0 0.0
          %377 = vmatpush.msra.mxu0 %v324
          %378 = vmatmul.f32.gmra.mxu0 %v360
          %v379 = vpop.f32.mrf.mxu0
          %v380 = vadd.f32 %v356, %v379
          %381 = vdwg.mxu0
          %382 = vmatpush.msra.mxu0 0.0
          %383 = vmatpush.msra.mxu0 0.0
          %384 = vmatpush.msra.mxu0 0.0
          %385 = vmatpush.msra.mxu0 0.0
          %386 = vmatpush.msra.mxu0 0.0
          %387 = vmatpush.msra.mxu0 0.0
          %388 = vmatpush.msra.mxu0 0.0
          %389 = vmatpush.msra.mxu0 0.0
          %390 = vmatpush.msra.mxu0 0.0
          %391 = vmatpush.msra.mxu0 0.0
          %392 = vmatpush.msra.mxu0 0.0
          %393 = vmatpush.msra.mxu0 0.0
          %394 = vmatpush.msra.mxu0 0.0
          %395 = vmatpush.msra.mxu0 0.0
          %396 = vmatpush.msra.mxu0 0.0
          %397 = vmatpush.msra.mxu0 %v325
          %398 = vmatmul.f32.gmra.mxu0 %v360
          %v399 = vpop.f32.mrf.mxu0
          %v400 = vadd.f32 %v356, %v399
          %401 = vdwg.mxu0
          %s402 = scalar_lea.vmem [#allocation10], 8
          %v403 = vld [vmem:[%s402] sm:$0xff]
          %404 = vset.pattern.permute.xlu0 1
          %405 = vperm.xlu0 %404, %v352
          %v406 = vpop.permute.xlu0 %405
          %v409 = vsel %vm358, %v403, 0
          %411 = vmatpush.msra.mxu0 0.0
          %412 = vmatpush.msra.mxu0 0.0
          %413 = vmatpush.msra.mxu0 0.0
          %414 = vmatpush.msra.mxu0 0.0
          %415 = vmatpush.msra.mxu0 0.0
          %416 = vmatpush.msra.mxu0 0.0
          %417 = vmatpush.msra.mxu0 0.0
          %418 = vmatpush.msra.mxu0 0.0
          %419 = vmatpush.msra.mxu0 0.0
          %420 = vmatpush.msra.mxu0 0.0
          %421 = vmatpush.msra.mxu0 0.0
          %422 = vmatpush.msra.mxu0 0.0
          %423 = vmatpush.msra.mxu0 0.0
          %424 = vmatpush.msra.mxu0 0.0
          %425 = vmatpush.msra.mxu0 0.0
          %426 = vmatpush.msra.mxu0 %v349
          %427 = vmatmul.f32.gmra.mxu0 %v409
          %v428 = vpop.f32.mrf.mxu0
          %v429 = vadd.f32 %v406, %v428
          %430 = vdwg.mxu0
          %431 = vmatpush.msra.mxu0 0.0
          %432 = vmatpush.msra.mxu0 0.0
          %433 = vmatpush.msra.mxu0 0.0
          %434 = vmatpush.msra.mxu0 0.0
          %435 = vmatpush.msra.mxu0 0.0
          %436 = vmatpush.msra.mxu0 0.0
          %437 = vmatpush.msra.mxu0 0.0
          %438 = vmatpush.msra.mxu0 0.0
          %439 = vmatpush.msra.mxu0 0.0
          %440 = vmatpush.msra.mxu0 0.0
          %441 = vmatpush.msra.mxu0 0.0
          %442 = vmatpush.msra.mxu0 0.0
          %443 = vmatpush.msra.mxu0 0.0
          %444 = vmatpush.msra.mxu0 0.0
          %445 = vmatpush.msra.mxu0 0.0
          %446 = vmatpush.msra.mxu0 %v350
          %447 = vmatmul.f32.gmra.mxu0 %v409
          %v448 = vpop.f32.mrf.mxu0
          %v449 = vadd.f32 %v406, %v448
          %450 = vdwg.mxu0
          %s451 = scalar_lea.vmem [#allocation10], 16
          %v452 = vld [vmem:[%s451] sm:$0xff]
          %453 = vset.pattern.permute.xlu0 2
          %454 = vperm.xlu0 %453, %v352
          %v455 = vpop.permute.xlu0 %454
          %v458 = vsel %vm358, %v452, 0
          %460 = vmatpush.msra.mxu0 0.0
          %461 = vmatpush.msra.mxu0 0.0
          %462 = vmatpush.msra.mxu0 0.0
          %463 = vmatpush.msra.mxu0 0.0
          %464 = vmatpush.msra.mxu0 0.0
          %465 = vmatpush.msra.mxu0 0.0
          %466 = vmatpush.msra.mxu0 0.0
          %467 = vmatpush.msra.mxu0 0.0
          %468 = vmatpush.msra.mxu0 0.0
          %469 = vmatpush.msra.mxu0 0.0
          %470 = vmatpush.msra.mxu0 0.0
          %471 = vmatpush.msra.mxu0 0.0
          %472 = vmatpush.msra.mxu0 0.0
          %473 = vmatpush.msra.mxu0 0.0
          %474 = vmatpush.msra.mxu0 0.0
          %475 = vmatpush.msra.mxu0 %v292
          %476 = vmatmul.f32.gmra.mxu0 %v458
          %v477 = vpop.f32.mrf.mxu0
          %v478 = vadd.f32 %v455, %v477
          %479 = vdwg.mxu0
          %480 = vmatpush.msra.mxu0 0.0
          %481 = vmatpush.msra.mxu0 0.0
          %482 = vmatpush.msra.mxu0 0.0
          %483 = vmatpush.msra.mxu0 0.0
          %484 = vmatpush.msra.mxu0 0.0
          %485 = vmatpush.msra.mxu0 0.0
          %486 = vmatpush.msra.mxu0 0.0
          %487 = vmatpush.msra.mxu0 0.0
          %488 = vmatpush.msra.mxu0 0.0
          %489 = vmatpush.msra.mxu0 0.0
          %490 = vmatpush.msra.mxu0 0.0
          %491 = vmatpush.msra.mxu0 0.0
          %492 = vmatpush.msra.mxu0 0.0
          %493 = vmatpush.msra.mxu0 0.0
          %494 = vmatpush.msra.mxu0 0.0
          %495 = vmatpush.msra.mxu0 %v293
          %496 = vmatmul.f32.gmra.mxu0 %v458
          %v497 = vpop.f32.mrf.mxu0
          %v498 = vadd.f32 %v455, %v497
          %499 = vdwg.mxu0
          %500 = vst [vmem:[#allocation2] sm:$0xff] %v380
          %501 = vst [vmem:[#allocation2 + $0x8] sm:$0xff] %v400
          %502 = vst [vmem:[#allocation3] sm:$0xff] %v429
          %503 = vst [vmem:[#allocation3 + $0x8] sm:$0xff] %v449
          %504 = vst [vmem:[#allocation4] sm:$0xff] %v478
          %505 = vst [vmem:[#allocation4 + $0x8] sm:$0xff] %v498
        $region52: #{tpu_custom_call.1} parent=35 // pred_fallthru
          _
        %s506 = smul.u32 %s29, 128
        %s507 = sshra.s32 %s506, 7
        %s508 = sand.u32 %s506, 127
        %s509 = smul.addr %s507, 8
        %s510 = scalar_lea.vmem [#allocation2], %s509
        %v511 = vld [vmem:[%s510] sm:$0xff]
        %v512 = vld [vmem:[#allocation3] sm:$0xff]
        %v513 = vld [vmem:[#allocation3 + $0x8] sm:$0xff]
        %514 = vxpose.xlu0.b32.start [1/16] %v511, 128
        %515 = vxpose.xlu0.b32.cont [2/16] 0.0, 128
        %516 = vxpose.xlu0.b32.cont [3/16] 0.0, 128
        %517 = vxpose.xlu0.b32.cont [4/16] 0.0, 128
        %518 = vxpose.xlu0.b32.cont [5/16] 0.0, 128
        %519 = vxpose.xlu0.b32.cont [6/16] 0.0, 128
        %520 = vxpose.xlu0.b32.cont [7/16] 0.0, 128
        %521 = vxpose.xlu0.b32.cont [8/16] 0.0, 128
        %522 = vxpose.xlu0.b32.cont [9/16] 0.0, 128
        %523 = vxpose.xlu0.b32.cont [10/16] 0.0, 128
        %524 = vxpose.xlu0.b32.cont [11/16] 0.0, 128
        %525 = vxpose.xlu0.b32.cont [12/16] 0.0, 128
        %526 = vxpose.xlu0.b32.cont [13/16] 0.0, 128
        %527 = vxpose.xlu0.b32.cont [14/16] 0.0, 128
        %528 = vxpose.xlu0.b32.cont [15/16] 0.0, 128
        %529 = vxpose.xlu0.b32.end [16/16] 0.0, 128
        %v530 = vpop.trf.xlu0
        %v531 = vpop.trf.xlu0
        %v532 = vpop.trf.xlu0
        %v533 = vpop.trf.xlu0
        %v534 = vpop.trf.xlu0
        %v535 = vpop.trf.xlu0
        %v536 = vpop.trf.xlu0
        %v537 = vpop.trf.xlu0
        %v538 = vpop.trf.xlu0
        %v539 = vpop.trf.xlu0
        %v540 = vpop.trf.xlu0
        %v541 = vpop.trf.xlu0
        %v542 = vpop.trf.xlu0
        %v543 = vpop.trf.xlu0
        %v544 = vpop.trf.xlu0
        %v545 = vpop.trf.xlu0
        %vm546 = vcmask 64512
        %v548 = vsel %vm546, %v530, 0
        %v551 = vsel %vm546, %v531, 0
        %v554 = vsel %vm546, %v532, 0
        %v557 = vsel %vm546, %v533, 0
        %v560 = vsel %vm546, %v534, 0
        %v563 = vsel %vm546, %v535, 0
        %v566 = vsel %vm546, %v536, 0
        %v569 = vsel %vm546, %v537, 0
        %v572 = vsel %vm546, %v538, 0
        %v575 = vsel %vm546, %v539, 0
        %v578 = vsel %vm546, %v540, 0
        %v581 = vsel %vm546, %v541, 0
        %v584 = vsel %vm546, %v542, 0
        %v587 = vsel %vm546, %v543, 0
        %v590 = vsel %vm546, %v544, 0
        %v593 = vsel %vm546, %v545, 0
        %595 = vmatpush.msra.mxu0 0.0
        %596 = vmatpush.msra.mxu0 0.0
        %597 = vmatpush.msra.mxu0 0.0
        %598 = vmatpush.msra.mxu0 0.0
        %599 = vmatpush.msra.mxu0 0.0
        %600 = vmatpush.msra.mxu0 0.0
        %601 = vmatpush.msra.mxu0 0.0
        %602 = vmatpush.msra.mxu0 0.0
        %603 = vmatpush.msra.mxu0 0.0
        %604 = vmatpush.msra.mxu0 0.0
        %605 = vmatpush.msra.mxu0 0.0
        %606 = vmatpush.msra.mxu0 0.0
        %607 = vmatpush.msra.mxu0 0.0
        %608 = vmatpush.msra.mxu0 0.0
        %609 = vmatpush.msra.mxu0 0.0
        %610 = vmatpush.msra.mxu0 %v512
        %611 = vmatmul.f32.gmra.mxu0 %v548
        %v612 = vpop.f32.mrf.mxu0
        %v613 = vadd.f32 0.0, %v612
        %614 = vmatmul.f32.gmra.mxu0 %v551
        %v615 = vpop.f32.mrf.mxu0
        %v616 = vadd.f32 0.0, %v615
        %617 = vmatmul.f32.gmra.mxu0 %v554
        %v618 = vpop.f32.mrf.mxu0
        %v619 = vadd.f32 0.0, %v618
        %620 = vmatmul.f32.gmra.mxu0 %v557
        %v621 = vpop.f32.mrf.mxu0
        %v622 = vadd.f32 0.0, %v621
        %623 = vmatmul.f32.gmra.mxu0 %v560
        %v624 = vpop.f32.mrf.mxu0
        %v625 = vadd.f32 0.0, %v624
        %626 = vmatmul.f32.gmra.mxu0 %v563
        %v627 = vpop.f32.mrf.mxu0
        %v628 = vadd.f32 0.0, %v627
        %629 = vmatmul.f32.gmra.mxu0 %v566
        %v630 = vpop.f32.mrf.mxu0
        %v631 = vadd.f32 0.0, %v630
        %632 = vmatmul.f32.gmra.mxu0 %v569
        %v633 = vpop.f32.mrf.mxu0
        %v634 = vadd.f32 0.0, %v633
        %635 = vmatmul.f32.gmra.mxu0 %v572
        %v636 = vpop.f32.mrf.mxu0
        %v637 = vadd.f32 0.0, %v636
        %638 = vmatmul.f32.gmra.mxu0 %v575
        %v639 = vpop.f32.mrf.mxu0
        %v640 = vadd.f32 0.0, %v639
        %641 = vmatmul.f32.gmra.mxu0 %v578
        %v642 = vpop.f32.mrf.mxu0
        %v643 = vadd.f32 0.0, %v642
        %644 = vmatmul.f32.gmra.mxu0 %v581
        %v645 = vpop.f32.mrf.mxu0
        %v646 = vadd.f32 0.0, %v645
        %647 = vmatmul.f32.gmra.mxu0 %v584
        %v648 = vpop.f32.mrf.mxu0
        %v649 = vadd.f32 0.0, %v648
        %650 = vmatmul.f32.gmra.mxu0 %v587
        %v651 = vpop.f32.mrf.mxu0
        %v652 = vadd.f32 0.0, %v651
        %653 = vmatmul.f32.gmra.mxu0 %v590
        %v654 = vpop.f32.mrf.mxu0
        %v655 = vadd.f32 0.0, %v654
        %656 = vmatmul.f32.gmra.mxu0 %v593
        %v657 = vpop.f32.mrf.mxu0
        %v658 = vadd.f32 0.0, %v657
        %659 = vdwg.mxu0
        %660 = vmatpush.msra.mxu0 0.0
        %661 = vmatpush.msra.mxu0 0.0
        %662 = vmatpush.msra.mxu0 0.0
        %663 = vmatpush.msra.mxu0 0.0
        %664 = vmatpush.msra.mxu0 0.0
        %665 = vmatpush.msra.mxu0 0.0
        %666 = vmatpush.msra.mxu0 0.0
        %667 = vmatpush.msra.mxu0 0.0
        %668 = vmatpush.msra.mxu0 0.0
        %669 = vmatpush.msra.mxu0 0.0
        %670 = vmatpush.msra.mxu0 0.0
        %671 = vmatpush.msra.mxu0 0.0
        %672 = vmatpush.msra.mxu0 0.0
        %673 = vmatpush.msra.mxu0 0.0
        %674 = vmatpush.msra.mxu0 0.0
        %675 = vmatpush.msra.mxu0 %v513
        %676 = vmatmul.f32.gmra.mxu0 %v548
        %v677 = vpop.f32.mrf.mxu0
        %v678 = vadd.f32 0.0, %v677
        %679 = vmatmul.f32.gmra.mxu0 %v551
        %v680 = vpop.f32.mrf.mxu0
        %v681 = vadd.f32 0.0, %v680
        %682 = vmatmul.f32.gmra.mxu0 %v554
        %v683 = vpop.f32.mrf.mxu0
        %v684 = vadd.f32 0.0, %v683
        %685 = vmatmul.f32.gmra.mxu0 %v557
        %v686 = vpop.f32.mrf.mxu0
        %v687 = vadd.f32 0.0, %v686
        %688 = vmatmul.f32.gmra.mxu0 %v560
        %v689 = vpop.f32.mrf.mxu0
        %v690 = vadd.f32 0.0, %v689
        %691 = vmatmul.f32.gmra.mxu0 %v563
        %v692 = vpop.f32.mrf.mxu0
        %v693 = vadd.f32 0.0, %v692
        %694 = vmatmul.f32.gmra.mxu0 %v566
        %v695 = vpop.f32.mrf.mxu0
        %v696 = vadd.f32 0.0, %v695
        %697 = vmatmul.f32.gmra.mxu0 %v569
        %v698 = vpop.f32.mrf.mxu0
        %v699 = vadd.f32 0.0, %v698
        %700 = vmatmul.f32.gmra.mxu0 %v572
        %v701 = vpop.f32.mrf.mxu0
        %v702 = vadd.f32 0.0, %v701
        %703 = vmatmul.f32.gmra.mxu0 %v575
        %v704 = vpop.f32.mrf.mxu0
        %v705 = vadd.f32 0.0, %v704
        %706 = vmatmul.f32.gmra.mxu0 %v578
        %v707 = vpop.f32.mrf.mxu0
        %v708 = vadd.f32 0.0, %v707
        %709 = vmatmul.f32.gmra.mxu0 %v581
        %v710 = vpop.f32.mrf.mxu0
        %v711 = vadd.f32 0.0, %v710
        %712 = vmatmul.f32.gmra.mxu0 %v584
        %v713 = vpop.f32.mrf.mxu0
        %v714 = vadd.f32 0.0, %v713
        %715 = vmatmul.f32.gmra.mxu0 %v587
        %v716 = vpop.f32.mrf.mxu0
        %v717 = vadd.f32 0.0, %v716
        %718 = vmatmul.f32.gmra.mxu0 %v590
        %v719 = vpop.f32.mrf.mxu0
        %v720 = vadd.f32 0.0, %v719
        %721 = vmatmul.f32.gmra.mxu0 %v593
        %v722 = vpop.f32.mrf.mxu0
        %v723 = vadd.f32 0.0, %v722
        %724 = vdwg.mxu0
        %v725 = vmax.f32 %v613, %v678
        %726 = vmax.xlane.f32.xlu0 %v725
        %v727 = vpop.xlane.xlu0 %726
        %v728 = vmax.f32 %v616, %v681
        %729 = vmax.xlane.f32.xlu0 %v728
        %v730 = vpop.xlane.xlu0 %729
        %v731 = vmax.f32 %v619, %v684
        %732 = vmax.xlane.f32.xlu0 %v731
        %v733 = vpop.xlane.xlu0 %732
        %v734 = vmax.f32 %v622, %v687
        %735 = vmax.xlane.f32.xlu0 %v734
        %v736 = vpop.xlane.xlu0 %735
        %v737 = vmax.f32 %v625, %v690
        %738 = vmax.xlane.f32.xlu0 %v737
        %v739 = vpop.xlane.xlu0 %738
        %v740 = vmax.f32 %v628, %v693
        %741 = vmax.xlane.f32.xlu0 %v740
        %v742 = vpop.xlane.xlu0 %741
        %v743 = vmax.f32 %v631, %v696
        %744 = vmax.xlane.f32.xlu0 %v743
        %v745 = vpop.xlane.xlu0 %744
        %v746 = vmax.f32 %v634, %v699
        %747 = vmax.xlane.f32.xlu0 %v746
        %v748 = vpop.xlane.xlu0 %747
        %v749 = vmax.f32 %v637, %v702
        %750 = vmax.xlane.f32.xlu0 %v749
        %v751 = vpop.xlane.xlu0 %750
        %v752 = vmax.f32 %v640, %v705
        %753 = vmax.xlane.f32.xlu0 %v752
        %v754 = vpop.xlane.xlu0 %753
        %v755 = vmax.f32 %v643, %v708
        %756 = vmax.xlane.f32.xlu0 %v755
        %v757 = vpop.xlane.xlu0 %756
        %v758 = vmax.f32 %v646, %v711
        %759 = vmax.xlane.f32.xlu0 %v758
        %v760 = vpop.xlane.xlu0 %759
        %v761 = vmax.f32 %v649, %v714
        %762 = vmax.xlane.f32.xlu0 %v761
        %v763 = vpop.xlane.xlu0 %762
        %v764 = vmax.f32 %v652, %v717
        %765 = vmax.xlane.f32.xlu0 %v764
        %v766 = vpop.xlane.xlu0 %765
        %v767 = vmax.f32 %v655, %v720
        %768 = vmax.xlane.f32.xlu0 %v767
        %v769 = vpop.xlane.xlu0 %768
        %v770 = vmax.f32 %v658, %v723
        %771 = vmax.xlane.f32.xlu0 %v770
        %v772 = vpop.xlane.xlu0 %771
        %v773 = vsub.f32 %v613, %v727
        %v774 = vsub.f32 %v678, %v727
        %v775 = vsub.f32 %v616, %v730
        %v776 = vsub.f32 %v681, %v730
        %v777 = vsub.f32 %v619, %v733
        %v778 = vsub.f32 %v684, %v733
        %v779 = vsub.f32 %v622, %v736
        %v780 = vsub.f32 %v687, %v736
        %v781 = vsub.f32 %v625, %v739
        %v782 = vsub.f32 %v690, %v739
        %v783 = vsub.f32 %v628, %v742
        %v784 = vsub.f32 %v693, %v742
        %v785 = vsub.f32 %v631, %v745
        %v786 = vsub.f32 %v696, %v745
        %v787 = vsub.f32 %v634, %v748
        %v788 = vsub.f32 %v699, %v748
        %v789 = vsub.f32 %v637, %v751
        %v790 = vsub.f32 %v702, %v751
        %v791 = vsub.f32 %v640, %v754
        %v792 = vsub.f32 %v705, %v754
        %v793 = vsub.f32 %v643, %v757
        %v794 = vsub.f32 %v708, %v757
        %v795 = vsub.f32 %v646, %v760
        %v796 = vsub.f32 %v711, %v760
        %v797 = vsub.f32 %v649, %v763
        %v798 = vsub.f32 %v714, %v763
        %v799 = vsub.f32 %v652, %v766
        %v800 = vsub.f32 %v717, %v766
        %v801 = vsub.f32 %v655, %v769
        %v802 = vsub.f32 %v720, %v769
        %v803 = vsub.f32 %v658, %v772
        %v804 = vsub.f32 %v723, %v772
        %v805 = vmul.f32 %v773, 1.442695
        %v806 = vpow.pop %v805
        %v807 = vmul.f32 %v774, 1.442695
        %v808 = vpow.pop %v807
        %v809 = vmul.f32 %v775, 1.442695
        %v810 = vpow.pop %v809
        %v811 = vmul.f32 %v776, 1.442695
        %v812 = vpow.pop %v811
        %v813 = vmul.f32 %v777, 1.442695
        %v814 = vpow.pop %v813
        %v815 = vmul.f32 %v778, 1.442695
        %v816 = vpow.pop %v815
        %v817 = vmul.f32 %v779, 1.442695
        %v818 = vpow.pop %v817
        %v819 = vmul.f32 %v780, 1.442695
        %v820 = vpow.pop %v819
        %v821 = vmul.f32 %v781, 1.442695
        %v822 = vpow.pop %v821
        %v823 = vmul.f32 %v782, 1.442695
        %v824 = vpow.pop %v823
        %v825 = vmul.f32 %v783, 1.442695
        %v826 = vpow.pop %v825
        %v827 = vmul.f32 %v784, 1.442695
        %v828 = vpow.pop %v827
        %v829 = vmul.f32 %v785, 1.442695
        %v830 = vpow.pop %v829
        %v831 = vmul.f32 %v786, 1.442695
        %v832 = vpow.pop %v831
        %v833 = vmul.f32 %v787, 1.442695
        %v834 = vpow.pop %v833
        %v835 = vmul.f32 %v788, 1.442695
        %v836 = vpow.pop %v835
        %v837 = vmul.f32 %v789, 1.442695
        %v838 = vpow.pop %v837
        %v839 = vmul.f32 %v790, 1.442695
        %v840 = vpow.pop %v839
        %v841 = vmul.f32 %v791, 1.442695
        %v842 = vpow.pop %v841
        %v843 = vmul.f32 %v792, 1.442695
        %v844 = vpow.pop %v843
        %v845 = vmul.f32 %v793, 1.442695
        %v846 = vpow.pop %v845
        %v847 = vmul.f32 %v794, 1.442695
        %v848 = vpow.pop %v847
        %v849 = vmul.f32 %v795, 1.442695
        %v850 = vpow.pop %v849
        %v851 = vmul.f32 %v796, 1.442695
        %v852 = vpow.pop %v851
        %v853 = vmul.f32 %v797, 1.442695
        %v854 = vpow.pop %v853
        %v855 = vmul.f32 %v798, 1.442695
        %v856 = vpow.pop %v855
        %v857 = vmul.f32 %v799, 1.442695
        %v858 = vpow.pop %v857
        %v859 = vmul.f32 %v800, 1.442695
        %v860 = vpow.pop %v859
        %v861 = vmul.f32 %v801, 1.442695
        %v862 = vpow.pop %v861
        %v863 = vmul.f32 %v802, 1.442695
        %v864 = vpow.pop %v863
        %v865 = vmul.f32 %v803, 1.442695
        %v866 = vpow.pop %v865
        %v867 = vmul.f32 %v804, 1.442695
        %v868 = vpow.pop %v867
        %v869 = vadd.f32 %v806, %v808
        %870 = vadd.xlane.f32.xlu0 %v869
        %v871 = vpop.xlane.xlu0 %870
        %v872 = vadd.f32 %v810, %v812
        %873 = vadd.xlane.f32.xlu0 %v872
        %v874 = vpop.xlane.xlu0 %873
        %v875 = vadd.f32 %v814, %v816
        %876 = vadd.xlane.f32.xlu0 %v875
        %v877 = vpop.xlane.xlu0 %876
        %v878 = vadd.f32 %v818, %v820
        %879 = vadd.xlane.f32.xlu0 %v878
        %v880 = vpop.xlane.xlu0 %879
        %v881 = vadd.f32 %v822, %v824
        %882 = vadd.xlane.f32.xlu0 %v881
        %v883 = vpop.xlane.xlu0 %882
        %v884 = vadd.f32 %v826, %v828
        %885 = vadd.xlane.f32.xlu0 %v884
        %v886 = vpop.xlane.xlu0 %885
        %v887 = vadd.f32 %v830, %v832
        %888 = vadd.xlane.f32.xlu0 %v887
        %v889 = vpop.xlane.xlu0 %888
        %v890 = vadd.f32 %v834, %v836
        %891 = vadd.xlane.f32.xlu0 %v890
        %v892 = vpop.xlane.xlu0 %891
        %v893 = vadd.f32 %v838, %v840
        %894 = vadd.xlane.f32.xlu0 %v893
        %v895 = vpop.xlane.xlu0 %894
        %v896 = vadd.f32 %v842, %v844
        %897 = vadd.xlane.f32.xlu0 %v896
        %v898 = vpop.xlane.xlu0 %897
        %v899 = vadd.f32 %v846, %v848
        %900 = vadd.xlane.f32.xlu0 %v899
        %v901 = vpop.xlane.xlu0 %900
        %v902 = vadd.f32 %v850, %v852
        %903 = vadd.xlane.f32.xlu0 %v902
        %v904 = vpop.xlane.xlu0 %903
        %v905 = vadd.f32 %v854, %v856
        %906 = vadd.xlane.f32.xlu0 %v905
        %v907 = vpop.xlane.xlu0 %906
        %v908 = vadd.f32 %v858, %v860
        %909 = vadd.xlane.f32.xlu0 %v908
        %v910 = vpop.xlane.xlu0 %909
        %v911 = vadd.f32 %v862, %v864
        %912 = vadd.xlane.f32.xlu0 %v911
        %v913 = vpop.xlane.xlu0 %912
        %v914 = vadd.f32 %v866, %v868
        %915 = vadd.xlane.f32.xlu0 %v914
        %v916 = vpop.xlane.xlu0 %915
        %v917 = vrcp.pop %v871
        %v918 = vrcp.pop %v874
        %v919 = vrcp.pop %v877
        %v920 = vrcp.pop %v880
        %v921 = vrcp.pop %v883
        %v922 = vrcp.pop %v886
        %v923 = vrcp.pop %v889
        %v924 = vrcp.pop %v892
        %v925 = vrcp.pop %v895
        %v926 = vrcp.pop %v898
        %v927 = vrcp.pop %v901
        %v928 = vrcp.pop %v904
        %v929 = vrcp.pop %v907
        %v930 = vrcp.pop %v910
        %v931 = vrcp.pop %v913
        %v932 = vrcp.pop %v916
        %v933 = vmul.f32 %v871, %v917
        %v934 = vmul.f32 %v874, %v918
        %v935 = vmul.f32 %v877, %v919
        %v936 = vmul.f32 %v880, %v920
        %v937 = vmul.f32 %v883, %v921
        %v938 = vmul.f32 %v886, %v922
        %v939 = vmul.f32 %v889, %v923
        %v940 = vmul.f32 %v892, %v924
        %v941 = vmul.f32 %v895, %v925
        %v942 = vmul.f32 %v898, %v926
        %v943 = vmul.f32 %v901, %v927
        %v944 = vmul.f32 %v904, %v928
        %v945 = vmul.f32 %v907, %v929
        %v946 = vmul.f32 %v910, %v930
        %v947 = vmul.f32 %v913, %v931
        %v948 = vmul.f32 %v916, %v932
        %v949 = vsub.f32 2.0, %v933
        %v950 = vsub.f32 2.0, %v934
        %v951 = vsub.f32 2.0, %v935
        %v952 = vsub.f32 2.0, %v936
        %v953 = vsub.f32 2.0, %v937
        %v954 = vsub.f32 2.0, %v938
        %v955 = vsub.f32 2.0, %v939
        %v956 = vsub.f32 2.0, %v940
        %v957 = vsub.f32 2.0, %v941
        %v958 = vsub.f32 2.0, %v942
        %v959 = vsub.f32 2.0, %v943
        %v960 = vsub.f32 2.0, %v944
        %v961 = vsub.f32 2.0, %v945
        %v962 = vsub.f32 2.0, %v946
        %v963 = vsub.f32 2.0, %v947
        %v964 = vsub.f32 2.0, %v948
        %v965 = vmul.f32 %v917, %v949
        %v966 = vmul.f32 %v918, %v950
        %v967 = vmul.f32 %v919, %v951
        %v968 = vmul.f32 %v920, %v952
        %v969 = vmul.f32 %v921, %v953
        %v970 = vmul.f32 %v922, %v954
        %v971 = vmul.f32 %v923, %v955
        %v972 = vmul.f32 %v924, %v956
        %v973 = vmul.f32 %v925, %v957
        %v974 = vmul.f32 %v926, %v958
        %v975 = vmul.f32 %v927, %v959
        %v976 = vmul.f32 %v928, %v960
        %v977 = vmul.f32 %v929, %v961
        %v978 = vmul.f32 %v930, %v962
        %v979 = vmul.f32 %v931, %v963
        %v980 = vmul.f32 %v932, %v964
        %v981 = vmul.f32 %v806, %v965
        %v982 = vmul.f32 %v808, %v965
        %v983 = vmul.f32 %v810, %v966
        %v984 = vmul.f32 %v812, %v966
        %v985 = vmul.f32 %v814, %v967
        %v986 = vmul.f32 %v816, %v967
        %v987 = vmul.f32 %v818, %v968
        %v988 = vmul.f32 %v820, %v968
        %v989 = vmul.f32 %v822, %v969
        %v990 = vmul.f32 %v824, %v969
        %v991 = vmul.f32 %v826, %v970
        %v992 = vmul.f32 %v828, %v970
        %v993 = vmul.f32 %v830, %v971
        %v994 = vmul.f32 %v832, %v971
        %v995 = vmul.f32 %v834, %v972
        %v996 = vmul.f32 %v836, %v972
        %v997 = vmul.f32 %v838, %v973
        %v998 = vmul.f32 %v840, %v973
        %v999 = vmul.f32 %v842, %v974
        %v1000 = vmul.f32 %v844, %v974
        %v1001 = vmul.f32 %v846, %v975
        %v1002 = vmul.f32 %v848, %v975
        %v1003 = vmul.f32 %v850, %v976
        %v1004 = vmul.f32 %v852, %v976
        %v1005 = vmul.f32 %v854, %v977
        %v1006 = vmul.f32 %v856, %v977
        %v1007 = vmul.f32 %v858, %v978
        %v1008 = vmul.f32 %v860, %v978
        %v1009 = vmul.f32 %v862, %v979
        %v1010 = vmul.f32 %v864, %v979
        %v1011 = vmul.f32 %v866, %v980
        %v1012 = vmul.f32 %v868, %v980
        %v1013 = vld [vmem:[#allocation4] sm:$0xff]
        %v1014 = vld [vmem:[#allocation4 + $0x8] sm:$0xff]
        %1015 = vmatpush.xpose.msra.mxu0 %v1011
        %1016 = vmatpush.xpose.msra.mxu0 %v1009
        %1017 = vmatpush.xpose.msra.mxu0 %v1007
        %1018 = vmatpush.xpose.msra.mxu0 %v1005
        %1019 = vmatpush.xpose.msra.mxu0 %v1003
        %1020 = vmatpush.xpose.msra.mxu0 %v1001
        %1021 = vmatpush.xpose.msra.mxu0 %v999
        %1022 = vmatpush.xpose.msra.mxu0 %v997
        %1023 = vmatpush.xpose.msra.mxu0 %v995
        %1024 = vmatpush.xpose.msra.mxu0 %v993
        %1025 = vmatpush.xpose.msra.mxu0 %v991
        %1026 = vmatpush.xpose.msra.mxu0 %v989
        %1027 = vmatpush.xpose.msra.mxu0 %v987
        %1028 = vmatpush.xpose.msra.mxu0 %v985
        %1029 = vmatpush.xpose.msra.mxu0 %v983
        %1030 = vmatpush.xpose.msra.mxu0 %v981
        %1031 = vmatmul.f32.gmra.mxu0 %v1013
        %v1032 = vpop.f32.mrf.mxu0
        %v1033 = vadd.f32 0.0, %v1032
        %1034 = vdwg.mxu0
        %1035 = vmatpush.xpose.msra.mxu0 %v1012
        %1036 = vmatpush.xpose.msra.mxu0 %v1010
        %1037 = vmatpush.xpose.msra.mxu0 %v1008
        %1038 = vmatpush.xpose.msra.mxu0 %v1006
        %1039 = vmatpush.xpose.msra.mxu0 %v1004
        %1040 = vmatpush.xpose.msra.mxu0 %v1002
        %1041 = vmatpush.xpose.msra.mxu0 %v1000
        %1042 = vmatpush.xpose.msra.mxu0 %v998
        %1043 = vmatpush.xpose.msra.mxu0 %v996
        %1044 = vmatpush.xpose.msra.mxu0 %v994
        %1045 = vmatpush.xpose.msra.mxu0 %v992
        %1046 = vmatpush.xpose.msra.mxu0 %v990
        %1047 = vmatpush.xpose.msra.mxu0 %v988
        %1048 = vmatpush.xpose.msra.mxu0 %v986
        %1049 = vmatpush.xpose.msra.mxu0 %v984
        %1050 = vmatpush.xpose.msra.mxu0 %v982
        %1051 = vmatmul.f32.gmra.mxu0 %v1014
        %v1052 = vpop.f32.mrf.mxu0
        %v1053 = vadd.f32 %v1033, %v1052
        %1054 = vdwg.mxu0
        %s1055 = scalar_lea.vmem [#allocation10], 24
        %v1056 = vld [vmem:[%s1055] sm:$0xff]
        %v1057 = vld [vmem:[%s3] sm:$0xff]
        %1059 = vset.pattern.permute.xlu0 3
        %1060 = vperm.xlu0 %1059, %v1057
        %v1061 = vpop.permute.xlu0 %1060
        %v1064 = vsel %vm546, %v1056, 0
        %1066 = vmatpush.msra.mxu0 0.0
        %1067 = vmatpush.msra.mxu0 0.0
        %1068 = vmatpush.msra.mxu0 0.0
        %1069 = vmatpush.msra.mxu0 0.0
        %1070 = vmatpush.msra.mxu0 0.0
        %1071 = vmatpush.msra.mxu0 0.0
        %1072 = vmatpush.msra.mxu0 0.0
        %1073 = vmatpush.msra.mxu0 0.0
        %1074 = vmatpush.msra.mxu0 0.0
        %1075 = vmatpush.msra.mxu0 0.0
        %1076 = vmatpush.msra.mxu0 0.0
        %1077 = vmatpush.msra.mxu0 0.0
        %1078 = vmatpush.msra.mxu0 0.0
        %1079 = vmatpush.msra.mxu0 0.0
        %1080 = vmatpush.msra.mxu0 0.0
        %1081 = vmatpush.msra.mxu0 %v1053
        %1082 = vmatmul.f32.gmra.mxu0 %v1064
        %v1083 = vpop.f32.mrf.mxu0
        %v1084 = vadd.f32 %v1061, %v1083
        %1085 = vdwg.mxu0
        %s1086 = smul.addr %s507, 8
        %s1087 = scalar_lea.vmem %s240, %s1086 [#allocation5]
        %v1088 = vld [vmem:[%s1087] sm:$0xff]
        %v1089 = vadd.f32 %v1084, %v1088
        %1090 = vst [vmem:[%s285] sm:$0xff] %v1089
        %s1091 = sand.u32 %s140, 1
        %s1092 = scalar_lea.sflag [#allocation7], %s1091
        %s1093 = sand.u32 %s140, 1
        %s1094 = smul.addr %s1093, 8
        %s1095 = scalar_lea.vmem [#allocation11], %s1094
        // Predicated region
        $region53: #{tpu_custom_call.1} parent=35 // pred_check
          %p1096 = pneg %p150
        $region54: #{tpu_custom_call.1} parent=35 // pred_check_branch
          %1098 = sbr.rel (%p1096) target = $region56
        $region55: #{tpu_custom_call.1} parent=35 // pred_region
          %1100 = vsyncadd %s1092, 0
          %s1101 = smul.addr %s28, 2
          %s1102 = sadd.s32 %s29, %s1101
          %s1103 = smul.addr %s1102, 8
          %s1104 = scalar_lea.hbm %s4, %s1103
          %s1106 = sshll.u32 %s1095, 4
          %s1107 = int_to_ptr.vmem [resolvable:$true] %s1106
          %s1108 = sshll.u32 %s1104, 4
          %s1109 = int_to_ptr.hbm [resolvable:$true] %s1108
          %1111 = dma.vmem_to_hbm [thread:$0]  %s1107, 128, %s1109, %s1092
        $region56: #{tpu_custom_call.1} parent=35 // pred_fallthru
          _
      $region36: #{tpu_custom_call.1} parent=5 // pred_fallthru
        _
      %p1112 = scmp.le.s32.totalorder 2, %s19
      // Predicated region
      $region57: #{tpu_custom_call.1} parent=5 // pred_check
        %p1113 = pneg %p1112
      $region58: #{tpu_custom_call.1} parent=5 // pred_check_branch
        %1115 = sbr.rel (%p1113) target = $region60
      $region59: #{tpu_custom_call.1} parent=5 // pred_region
        %s1116 = ssub.s32 %s19, 2
        // Predicated region
        $region61: #{tpu_custom_call.1} parent=59 // pred_check
          %p1117 = pneg %p156
        $region62: #{tpu_custom_call.1} parent=59 // pred_check_branch
          %1119 = sbr.rel (%p1117) target = $region64
        $region63: #{tpu_custom_call.1} parent=59 // pred_region
          %s1120 = sand.u32 %s141, 1
          %s1121 = scalar_lea.sflag [#allocation7], %s1120
          %s1122 = sand.u32 %s141, 1
          %s1123 = smul.addr %s1122, 8
          %s1124 = scalar_lea.vmem [#allocation11], %s1123
          %1126 = dma.done %s1121, 128
        $region64: #{tpu_custom_call.1} parent=59 // pred_fallthru
          _
      $region60: #{tpu_custom_call.1} parent=5 // pred_fallthru
        _
    $region6: #{tpu_custom_call.1} parent=1 // loop_footer
      %s23 = sadd.s32 1, %s19
    $region7: #{tpu_custom_call.1} parent=1 // loop_footer_branch
      %18 = sbr.rel target = $region3
    $region8: #{tpu_custom_call.1} parent=1 // loop_exit
      _
    %1127 = vsyncpa [#allocation6], 1
    %s1128 = scalar_lea.sflag [#allocation6], 1
    %1129 = vsyncpa %s1128, 1
    %1130 = vsyncpa [#allocation9], 1
    %s1131 = scalar_lea.sflag [#allocation9], 1
    %1132 = vsyncpa %s1131, 1
    %1133 = vsyncpa [#allocation7], 1
    %s1134 = scalar_lea.sflag [#allocation7], 1
    %1135 = vsyncpa %s1134, 1

</llo_original>
